<compile_context>
chip_gen: v7x
topology: tpu7x:2x2x1
jax: 0.10.0
libtpu: 0.0.40
codegen_flags: <defaults>
</compile_context>

<pallas_src>
import functools

import jax
import jax.numpy as jnp
from jax.experimental import pallas as pl
from jax.experimental.pallas import tpu as pltpu


def _round_up(v, m):
    return (v + m - 1) // m * m


# ----------------------------- Pallas kernels --------------------------------
def _resident_kernel(num_fcs, x_ref, *refs):
    """Whole MLP for one batch tile; every weight is VMEM-resident.

    refs layout: w1, b1, (w_i, b_i) for fcs 2..num_fcs, wf, bf, out
      x_ref : (tn, Kp)  f32  -- streamed batch tile (cast to bf16 in-kernel)
      w1    : (Kp, D1)  bf16 -- resident, single-buffered
      b1    : (1, D1)   f32
      w_i   : (D_{i-1}, D_i) bf16, b_i : (1, D_i) f32  -- resident
      wf    : (D_last, Cp) bf16, bf : (1, Cp) f32      -- resident (lane-dense)
      out   : (tn, Cp)  f32
    """
    out_ref = refs[-1]
    h = x_ref[...].astype(jnp.bfloat16)             # VPU cast hides under DMA
    w1 = refs[0][...]
    b1 = refs[1][...]
    h = jnp.maximum(
        jnp.dot(h, w1, preferred_element_type=jnp.float32) + b1, 0.0
    ).astype(jnp.bfloat16)
    for i in range(num_fcs - 1):                    # fcs 2..N
        w = refs[2 + 2 * i][...]
        b = refs[3 + 2 * i][...]
        h = jnp.maximum(
            jnp.dot(h, w, preferred_element_type=jnp.float32) + b, 0.0
        ).astype(jnp.bfloat16)
    wf = refs[2 * num_fcs][...]                     # fc_IoU
    bf = refs[2 * num_fcs + 1][...]
    out_ref[...] = jnp.dot(h, wf, preferred_element_type=jnp.float32) + bf


def _splitk_kernel(num_fcs, x_ref, w1_ref, b1_ref, *refs):
    """Split-K fc1 accumulation + fused MLP epilogue (fallback for huge fc1).

    refs layout: (w_i, b_i) for fcs 2..num_fcs, wf, bf, out, acc
      x_ref : (tn, tk) f32 (cast in-kernel), w1_ref : (tk, D1) bf16 (streamed)
      acc   : (tn, D1) f32 VMEM scratch
    """
    out_ref = refs[-2]
    acc_ref = refs[-1]
    rest = refs[:-2]
    k = pl.program_id(1)

    @pl.when(k == 0)
    def _init():
        # Initialise the accumulator with the broadcast fc1 bias.
        acc_ref[...] = jnp.broadcast_to(b1_ref[...], acc_ref.shape)

    acc_ref[...] += jnp.dot(
        x_ref[...].astype(jnp.bfloat16), w1_ref[...],
        preferred_element_type=jnp.float32,
    )

    @pl.when(k == pl.num_programs(1) - 1)
    def _epilogue():
        h = jnp.maximum(acc_ref[...], 0.0).astype(jnp.bfloat16)  # ReLU(fc1)
        for i in range(num_fcs - 1):                              # fcs 2..N
            w = rest[2 * i][...]
            b = rest[2 * i + 1][...]
            h = jnp.maximum(
                jnp.dot(h, w, preferred_element_type=jnp.float32) + b, 0.0
            ).astype(jnp.bfloat16)
        wf = rest[2 * (num_fcs - 1)][...]                         # fc_IoU
        bf = rest[2 * (num_fcs - 1) + 1][...]
        out_ref[...] = jnp.dot(h, wf, preferred_element_type=jnp.float32) + bf


# --------------------------- parameter preparation ---------------------------
def prepare_params(fc_params, final_w, final_b):
    """Pad + cast the static weights ONCE, outside the per-call hot path."""
    num_fcs = len(fc_params)
    assert num_fcs >= 1, "conv-only IoU_head branch not supported"
    w1, b1 = fc_params[0]
    k_dim = w1.shape[0]
    k_pad = _round_up(k_dim, 128)
    d1 = w1.shape[1]
    out_dim = final_w.shape[1]
    c_pad = _round_up(out_dim, 128)                 # lane-dense output
    return {
        "num_fcs": num_fcs,
        "k_dim": k_dim,
        "k_pad": k_pad,
        "d1": d1,
        "d_last": final_w.shape[0],
        "out_dim": out_dim,
        "c_pad": c_pad,
        "w1": jnp.pad(w1, ((0, k_pad - k_dim), (0, 0))).astype(jnp.bfloat16),
        "b1": b1.reshape(1, -1).astype(jnp.float32),
        "mid": [
            (w.astype(jnp.bfloat16), b.reshape(1, -1).astype(jnp.float32))
            for w, b in fc_params[1:]
        ],
        "wf": jnp.pad(final_w, ((0, 0), (0, c_pad - out_dim))).astype(jnp.bfloat16),
        "bf": jnp.pad(final_b, (0, c_pad - out_dim)).reshape(1, -1).astype(jnp.float32),
    }


def _pick_tk(k_pad, tk_request, tk_cap):
    """Largest 128-multiple divisor of k_pad not exceeding min(cap, request)."""
    cap = tk_cap if tk_request is None else min(tk_cap, tk_request)
    m = k_pad // 128
    best = 128
    for d in range(1, m + 1):
        if m % d == 0 and d * 128 <= cap:
            best = d * 128
    return best


# ------------------------------- wrapper --------------------------------------
def iou_head_forward(
    x_nchw,
    prepared,
    *,
    tn=None,
    tk=None,
    vmem_budget_bytes=48 << 20,
    force_split_k=False,
):
    """Runs the IoU_head forward pass.

    Args:
      x_nchw:   (N, C, H, W) float32 ROI features.
      prepared: output of prepare_params() (weights pre-padded / pre-cast).
      tn, tk:   optional batch / fc1-reduction tile overrides.
      vmem_budget_bytes: VMEM budget used to choose resident-vs-split-K and tk.
      force_split_k: force the split-K fallback path (testing / huge fc1).
    Returns:
      IoU_pred: (N, num_classes) float32.
    """
    num_fcs = prepared["num_fcs"]
    k_dim = prepared["k_dim"]
    k_pad = prepared["k_pad"]
    d1 = prepared["d1"]
    out_dim = prepared["out_dim"]
    c_pad = prepared["c_pad"]

    n = x_nchw.shape[0]
    x_flat = x_nchw.reshape(n, -1)          # same semantics as torch .view(N, -1)
    assert x_flat.shape[1] == k_dim

    # --- batch tile: target 256 (fills 256x256 MXU), keep >=2 tiles for megacore
    n_pad8 = _round_up(n, 8)
    if tn is None:
        tn = min(256, n_pad8)
        if n_pad8 // tn < 2 and n_pad8 >= 16:
            tn = _round_up((n_pad8 + 1) // 2, 8)
    tn = max(8, min(_round_up(tn, 8), n_pad8))
    n_pad = _round_up(n, tn)

    # --- VMEM bookkeeping --------------------------------------------------
    w1_bytes = int(prepared["w1"].size) * 2
    later_w_bytes = (
        sum(int(w.size) * 2 for w, _ in prepared["mid"]) + int(prepared["wf"].size) * 2
    )
    b_bytes = 4 * (
        int(prepared["b1"].size)
        + sum(int(b.size) for _, b in prepared["mid"])
        + int(prepared["bf"].size)
    )
    out_pipe_bytes = 2 * tn * c_pad * 4
    resident_bytes = (
        w1_bytes + later_w_bytes + b_bytes
        + 2 * tn * k_pad * 4            # f32 x tile, double-buffered
        + out_pipe_bytes
        + 2 * tn * d1 * 4               # activation / compiler headroom
    )
    use_resident = (not force_split_k) and resident_bytes <= vmem_budget_bytes
    vmem_limit = int(min(110 << 20, max(56 << 20, vmem_budget_bytes + (8 << 20))))

    # --- cost estimate (helps XLA schedule around the custom call) ----------
    dims = [d1] + [int(w.shape[1]) for w, _ in prepared["mid"]]
    flops = 2 * n * (
        k_dim * d1
        + sum(dims[i] * dims[i + 1] for i in range(len(dims) - 1))
        + prepared["d_last"] * out_dim
    )
    bytes_accessed = (
        n * k_dim * 4 + w1_bytes + later_w_bytes + b_bytes + n * out_dim * 4
    )
    cost = pl.CostEstimate(
        flops=int(flops), transcendentals=0, bytes_accessed=int(bytes_accessed)
    )

    # x stays f32 (cast to bf16 inside the kernel); pad is a no-op when aligned.
    x_p = jnp.pad(x_flat, ((0, n_pad - n), (0, k_pad - k_dim)))
    single = pl.Buffered(1)                     # constant-index => 1 buffer

    if use_resident:
        # ---------------- resident-w1 path: grid over batch tiles only -------
        args = [x_p, prepared["w1"], prepared["b1"]]
        in_specs = [
            pl.BlockSpec((tn, k_pad), lambda i: (i, 0)),
            pl.BlockSpec((k_pad, d1), lambda i: (0, 0), pipeline_mode=single),
            pl.BlockSpec((1, d1), lambda i: (0, 0), pipeline_mode=single),
        ]
        for w, b in prepared["mid"]:
            args += [w, b]
            in_specs += [
                pl.BlockSpec(w.shape, lambda i: (0, 0), pipeline_mode=single),
                pl.BlockSpec((1, w.shape[1]), lambda i: (0, 0), pipeline_mode=single),
            ]
        args += [prepared["wf"], prepared["bf"]]
        in_specs += [
            pl.BlockSpec(prepared["wf"].shape, lambda i: (0, 0), pipeline_mode=single),
            pl.BlockSpec((1, c_pad), lambda i: (0, 0), pipeline_mode=single),
        ]
        out = pl.pallas_call(
            functools.partial(_resident_kernel, num_fcs),
            out_shape=jax.ShapeDtypeStruct((n_pad, c_pad), jnp.float32),
            grid_spec=pltpu.PrefetchScalarGridSpec(
                num_scalar_prefetch=0,
                grid=(n_pad // tn,),
                in_specs=in_specs,
                out_specs=pl.BlockSpec((tn, c_pad), lambda i: (i, 0)),
            ),
            compiler_params=pltpu.CompilerParams(
                dimension_semantics=("parallel",),
                vmem_limit_bytes=vmem_limit,
            ),
            cost_estimate=cost,
        )(*args)
        return out[:n, :out_dim]

    # ---------------- split-K fallback: fc1 weight streamed along K ----------
    fixed = later_w_bytes + b_bytes + tn * d1 * 4 + out_pipe_bytes
    per_tk = 2 * d1 * 2 + 2 * tn * 4            # bf16 w1 tile + f32 x tile (x2 bufs)
    tk_cap = max(128, int((vmem_budget_bytes - fixed) // per_tk))
    tk = _pick_tk(k_pad, tk, tk_cap)            # exact divisor => zero K padding waste

    args = [x_p, prepared["w1"], prepared["b1"]]
    in_specs = [
        pl.BlockSpec((tn, tk), lambda i, j: (i, j)),
        pl.BlockSpec((tk, d1), lambda i, j: (j, 0)),   # streamed, double-buffered
        pl.BlockSpec((1, d1), lambda i, j: (0, 0), pipeline_mode=single),
    ]
    for w, b in prepared["mid"]:
        args += [w, b]
        in_specs += [
            pl.BlockSpec(w.shape, lambda i, j: (0, 0), pipeline_mode=single),
            pl.BlockSpec((1, w.shape[1]), lambda i, j: (0, 0), pipeline_mode=single),
        ]
    args += [prepared["wf"], prepared["bf"]]
    in_specs += [
        pl.BlockSpec(prepared["wf"].shape, lambda i, j: (0, 0), pipeline_mode=single),
        pl.BlockSpec((1, c_pad), lambda i, j: (0, 0), pipeline_mode=single),
    ]
    out = pl.pallas_call(
        functools.partial(_splitk_kernel, num_fcs),
        out_shape=jax.ShapeDtypeStruct((n_pad, c_pad), jnp.float32),
        grid_spec=pltpu.PrefetchScalarGridSpec(
            num_scalar_prefetch=0,
            grid=(n_pad // tn, k_pad // tk),            # K (reduction) axis last
            in_specs=in_specs,
            out_specs=pl.BlockSpec((tn, c_pad), lambda i, j: (i, 0)),
            scratch_shapes=[pltpu.VMEM((tn, d1), jnp.float32)],
        ),
        compiler_params=pltpu.CompilerParams(
            dimension_semantics=("parallel", "arbitrary"),
            vmem_limit_bytes=vmem_limit,
        ),
        cost_estimate=cost,
    )(*args)
    return out[:n, :out_dim]


# --------------------------- parameter construction --------------------------
def xavier_uniform(key, shape_in_out):
    fan_in, fan_out = shape_in_out
    limit = jnp.sqrt(6.0 / (fan_in + fan_out))
    return jax.random.uniform(
        key, (fan_in, fan_out), dtype=jnp.float32, minval=-limit, maxval=limit
    )


def build_params(key, in_dim, fc_out_channels, num_fcs, num_classes):
    """Deterministic synthetic params matching IoU_head.__init__ shapes."""
    keys = jax.random.split(key, num_fcs + 2)
    fc_params = []
    last = in_dim
    for i in range(num_fcs):
        w = xavier_uniform(keys[i], (last, fc_out_channels))  # init_weights()
        b = jnp.zeros((fc_out_channels,), jnp.float32)
        fc_params.append((w, b))
        last = fc_out_channels
    # fc_IoU: default nn.Linear init (uniform +/- 1/sqrt(fan_in))
    bound = 1.0 / jnp.sqrt(jnp.float32(last))
    wf = jax.random.uniform(keys[-2], (last, num_classes), jnp.float32, -bound, bound)
    bf = jax.random.uniform(keys[-1], (num_classes,), jnp.float32, -bound, bound)
    return fc_params, wf, bf


# ------------------------------- reference -----------------------------------
def reference_forward(x_nchw, fc_params, final_w, final_b):
    """Pure-JAX reference using the same bf16-in / f32-accumulate precision."""
    h = x_nchw.reshape(x_nchw.shape[0], -1)
    for w, b in fc_params:
        h = jnp.dot(h.astype(jnp.bfloat16), w.astype(jnp.bfloat16),
                    preferred_element_type=jnp.float32) + b
        h = jnp.maximum(h, 0.0)
    return jnp.dot(h.astype(jnp.bfloat16), final_w.astype(jnp.bfloat16),
                   preferred_element_type=jnp.float32) + final_b


# --------------------------------- main --------------------------------------
if __name__ == "__main__":
    # Small shapes consistent with the module: roi_feat_size=7 kept faithful,
    # channels / fc width shrunk for a quick synthetic run.  The defaults give
    # 2 batch tiles (tn=8) so the grid and megacore path are exercised; the
    # forced split-K run uses tk=128 -> 7 K steps including K padding 784->896
    # and class padding 81->128.
    N = 16                # number of ROIs (batch)
    C_IN = 16             # in_channels (reference default 256)
    ROI = 7               # roi_feat_size
    FC_OUT = 128          # fc_out_channels (reference default 1024)
    NUM_FCS = 2           # num_IoU_fcs
    NUM_CLASSES = 81      # num_classes (class_agnostic=False)

    key = jax.random.PRNGKey(0)
    k_x, k_p = jax.random.split(key)

    x = jax.random.normal(k_x, (N, C_IN, ROI, ROI), dtype=jnp.float32)

    in_dim = C_IN * ROI * ROI  # IoU_last_dim before first fc (= 784)
    fc_params, wf, bf = build_params(k_p, in_dim, FC_OUT, NUM_FCS, NUM_CLASSES)
    prepared = prepare_params(fc_params, wf, bf)   # one-time pad/cast of weights

    ref = reference_forward(x, fc_params, wf, bf)

    # Primary path: fully VMEM-resident weights, grid over batch tiles only.
    iou_pred = jax.block_until_ready(iou_head_forward(x, prepared))
    assert iou_pred.shape == (N, NUM_CLASSES)
    assert jnp.allclose(iou_pred, ref, atol=1e-2, rtol=1e-2), float(
        jnp.max(jnp.abs(iou_pred - ref))
    )

    # Fallback path: split-K streaming of the fc1 weight (forced for coverage).
    iou_pred_sk = jax.block_until_ready(
        iou_head_forward(x, prepared, tk=128, force_split_k=True)
    )
    assert iou_pred_sk.shape == (N, NUM_CLASSES)
    assert jnp.allclose(iou_pred_sk, ref, atol=1e-2, rtol=1e-2), float(
        jnp.max(jnp.abs(iou_pred_sk - ref))
    )

    print("KERNEL_OK")
</pallas_src>

<mosaic_0001>
module attributes {stable_mosaic.version = 11 : i64} {
  func.func @_resident_kernel(%arg0: i32, %arg1: memref<8x896xf32, #tpu.memory_space<vmem>>, %arg2: memref<896x128xbf16, #tpu.memory_space<vmem>>, %arg3: memref<1x128xf32, #tpu.memory_space<vmem>>, %arg4: memref<128x128xbf16, #tpu.memory_space<vmem>>, %arg5: memref<1x128xf32, #tpu.memory_space<vmem>>, %arg6: memref<128x128xbf16, #tpu.memory_space<vmem>>, %arg7: memref<1x128xf32, #tpu.memory_space<vmem>>, %arg8: memref<8x128xf32, #tpu.memory_space<vmem>>) attributes {dimension_semantics = [#tpu.dimension_semantics<parallel>], iteration_bounds = array<i64: 2>, scalar_prefetch = 0 : i64, scratch_operands = 0 : i64, tpu.core_type = #tpu.core_type<tc>, window_params = [{transform_indices = @transform_0, window_bounds = array<i64: 8, 896>}, {pipeline_mode = #tpu.pipeline_mode<synchronous>, transform_indices = @transform_1, window_bounds = array<i64: 896, 128>}, {pipeline_mode = #tpu.pipeline_mode<synchronous>, transform_indices = @transform_2, window_bounds = array<i64: 1, 128>}, {pipeline_mode = #tpu.pipeline_mode<synchronous>, transform_indices = @transform_3, window_bounds = array<i64: 128, 128>}, {pipeline_mode = #tpu.pipeline_mode<synchronous>, transform_indices = @transform_4, window_bounds = array<i64: 1, 128>}, {pipeline_mode = #tpu.pipeline_mode<synchronous>, transform_indices = @transform_5, window_bounds = array<i64: 128, 128>}, {pipeline_mode = #tpu.pipeline_mode<synchronous>, transform_indices = @transform_6, window_bounds = array<i64: 1, 128>}, {transform_indices = @transform_7, window_bounds = array<i64: 8, 128>}]} {
    %c0 = arith.constant 0 : index
    %c0_0 = arith.constant 0 : index
    %0 = vector.load %arg1[%c0, %c0_0] : memref<8x896xf32, #tpu.memory_space<vmem>>, vector<8x896xf32>
    %1 = arith.truncf %0 : vector<8x896xf32> to vector<8x896xbf16>
    %c0_1 = arith.constant 0 : index
    %c0_2 = arith.constant 0 : index
    %2 = vector.load %arg2[%c0_1, %c0_2] : memref<896x128xbf16, #tpu.memory_space<vmem>>, vector<896x128xbf16>
    %c0_3 = arith.constant 0 : index
    %c0_4 = arith.constant 0 : index
    %3 = vector.load %arg3[%c0_3, %c0_4] : memref<1x128xf32, #tpu.memory_space<vmem>>, vector<1x128xf32>
    %cst = arith.constant dense<0.000000e+00> : vector<8x128xf32>
    %4 = tpu.matmul %1, %2, %cst {dimension_numbers = #tpu.dot_dimension_numbers<[1], [0], [0], [1], [0, 0, 1, 1], [], []>} : vector<8x896xbf16>, vector<896x128xbf16>, vector<8x128xf32> -> vector<8x128xf32>
    %5 = vector.broadcast %3 : vector<1x128xf32> to vector<8x128xf32>
    %6 = arith.addf %4, %5 : vector<8x128xf32>
    %cst_5 = arith.constant 0.000000e+00 : f32
    %7 = vector.broadcast %cst_5 : f32 to vector<8x128xf32>
    %8 = arith.maximumf %6, %7 : vector<8x128xf32>
    %9 = arith.truncf %8 : vector<8x128xf32> to vector<8x128xbf16>
    %c0_6 = arith.constant 0 : index
    %c0_7 = arith.constant 0 : index
    %10 = vector.load %arg4[%c0_6, %c0_7] : memref<128x128xbf16, #tpu.memory_space<vmem>>, vector<128x128xbf16>
    %c0_8 = arith.constant 0 : index
    %c0_9 = arith.constant 0 : index
    %11 = vector.load %arg5[%c0_8, %c0_9] : memref<1x128xf32, #tpu.memory_space<vmem>>, vector<1x128xf32>
    %cst_10 = arith.constant dense<0.000000e+00> : vector<8x128xf32>
    %12 = tpu.matmul %9, %10, %cst_10 {dimension_numbers = #tpu.dot_dimension_numbers<[1], [0], [0], [1], [0, 0, 1, 1], [], []>} : vector<8x128xbf16>, vector<128x128xbf16>, vector<8x128xf32> -> vector<8x128xf32>
    %13 = vector.broadcast %11 : vector<1x128xf32> to vector<8x128xf32>
    %14 = arith.addf %12, %13 : vector<8x128xf32>
    %cst_11 = arith.constant 0.000000e+00 : f32
    %15 = vector.broadcast %cst_11 : f32 to vector<8x128xf32>
    %16 = arith.maximumf %14, %15 : vector<8x128xf32>
    %17 = arith.truncf %16 : vector<8x128xf32> to vector<8x128xbf16>
    %c0_12 = arith.constant 0 : index
    %c0_13 = arith.constant 0 : index
    %18 = vector.load %arg6[%c0_12, %c0_13] : memref<128x128xbf16, #tpu.memory_space<vmem>>, vector<128x128xbf16>
    %c0_14 = arith.constant 0 : index
    %c0_15 = arith.constant 0 : index
    %19 = vector.load %arg7[%c0_14, %c0_15] : memref<1x128xf32, #tpu.memory_space<vmem>>, vector<1x128xf32>
    %cst_16 = arith.constant dense<0.000000e+00> : vector<8x128xf32>
    %20 = tpu.matmul %17, %18, %cst_16 {dimension_numbers = #tpu.dot_dimension_numbers<[1], [0], [0], [1], [0, 0, 1, 1], [], []>} : vector<8x128xbf16>, vector<128x128xbf16>, vector<8x128xf32> -> vector<8x128xf32>
    %21 = vector.broadcast %19 : vector<1x128xf32> to vector<8x128xf32>
    %22 = arith.addf %20, %21 : vector<8x128xf32>
    %c0_17 = arith.constant 0 : index
    %c0_18 = arith.constant 0 : index
    %23 = vector.load %arg8[%c0_17, %c0_18] : memref<8x128xf32, #tpu.memory_space<vmem>>, vector<8x128xf32>
    tpu.vector_store %arg8[%c0_17, %c0_18], %22 {strides = array<i32>} : memref<8x128xf32, #tpu.memory_space<vmem>>, vector<8x128xf32>,
    return
  }
  func.func @transform_0(%arg0: i32) -> (i32, i32) {
    %c0_i32 = arith.constant 0 : i32
    %c0_i32_0 = arith.constant 0 : i32
    return %arg0, %c0_i32 : i32, i32
  }
  func.func @transform_1(%arg0: i32) -> (i32, i32) {
    %c0_i32 = arith.constant 0 : i32
    %c0_i32_0 = arith.constant 0 : i32
    %c0_i32_1 = arith.constant 0 : i32
    return %c0_i32, %c0_i32_0 : i32, i32
  }
  func.func @transform_2(%arg0: i32) -> (i32, i32) {
    %c0_i32 = arith.constant 0 : i32
    %c0_i32_0 = arith.constant 0 : i32
    %c0_i32_1 = arith.constant 0 : i32
    return %c0_i32, %c0_i32_0 : i32, i32
  }
  func.func @transform_3(%arg0: i32) -> (i32, i32) {
    %c0_i32 = arith.constant 0 : i32
    %c0_i32_0 = arith.constant 0 : i32
    %c0_i32_1 = arith.constant 0 : i32
    return %c0_i32, %c0_i32_0 : i32, i32
  }
  func.func @transform_4(%arg0: i32) -> (i32, i32) {
    %c0_i32 = arith.constant 0 : i32
    %c0_i32_0 = arith.constant 0 : i32
    %c0_i32_1 = arith.constant 0 : i32
    return %c0_i32, %c0_i32_0 : i32, i32
  }
  func.func @transform_5(%arg0: i32) -> (i32, i32) {
    %c0_i32 = arith.constant 0 : i32
    %c0_i32_0 = arith.constant 0 : i32
    %c0_i32_1 = arith.constant 0 : i32
    return %c0_i32, %c0_i32_0 : i32, i32
  }
  func.func @transform_6(%arg0: i32) -> (i32, i32) {
    %c0_i32 = arith.constant 0 : i32
    %c0_i32_0 = arith.constant 0 : i32
    %c0_i32_1 = arith.constant 0 : i32
    return %c0_i32, %c0_i32_0 : i32, i32
  }
  func.func @transform_7(%arg0: i32) -> (i32, i32) {
    %c0_i32 = arith.constant 0 : i32
    %c0_i32_0 = arith.constant 0 : i32
    return %arg0, %c0_i32 : i32, i32
  }
}

</mosaic_0001>

<llo_original>
// kernel: tpu_custom_call.1
$region0: #{tpu_custom_call.1}
  #allocation0 [shape = 'u32[]', space=smem, size = 0x4, offset = 0x4, fixed_abs, tag = 'smem constant byte address 0x4 - core index']
  #allocation1 [shape = 'u32[144,128]{1,0:T(1,128)}', space=vmem, size = 0x12000, scoped, tag = 'internal scratch']
  %s0 = inlined_call_operand.hbm [shape: f32[16,896], index: 0, kind: input, shape index: {}]
  %s1 = inlined_call_operand.hbm [shape: bf16[896,128], index: 1, kind: input, shape index: {}]
  %s2 = inlined_call_operand.vmem [shape: f32[1,128], index: 2, kind: input, shape index: {}]
  %s3 = inlined_call_operand.hbm [shape: bf16[128,128], index: 3, kind: input, shape index: {}]
  %s4 = inlined_call_operand.vmem [shape: f32[1,128], index: 4, kind: input, shape index: {}]
  %s5 = inlined_call_operand.hbm [shape: bf16[128,128], index: 5, kind: input, shape index: {}]
  %s6 = inlined_call_operand.vmem [shape: f32[1,128], index: 6, kind: input, shape index: {}]
  %s7 = inlined_call_operand.hbm [shape: f32[16,128], index: 7, kind: output, shape index: {}]
  %s8 = sld [smem:[#allocation0]]
  $region77: #{tpu_custom_call.1} parent=0
    _
  %s10 = ssub.s32 1, %s8
  %s11 = scalar_select 0, %s10, %s8
  $region1: #{tpu_custom_call.1} parent=0
    #allocation2 [shape = 'u8[57344]{0}', space=vmem, size = 0xe000, scoped, tag = 'input window, operand 0']
    #allocation3 [shape = 's32[2]{0}', space=sflag, size = 0x8, scoped, tag = 'scoped memory for tpu_custom_call.1']
    #allocation4 [shape = 's32[2]{0}', space=sflag, size = 0x8, scoped, tag = 'scoped memory for tpu_custom_call.1']
    #allocation5 [shape = 'u8[229376]{0}', space=vmem, size = 0x38000, scoped, tag = 'input window, operand 1, single buffered']
    #allocation6 [shape = 's32[1]{0}', space=sflag, size = 0x4, scoped, tag = 'scoped memory for tpu_custom_call.1']
    #allocation7 [shape = 'u8[32768]{0}', space=vmem, size = 0x8000, scoped, tag = 'input window, operand 3, single buffered']
    #allocation8 [shape = 'u8[32768]{0}', space=vmem, size = 0x8000, scoped, tag = 'input window, operand 5, single buffered']
    #allocation9 [shape = 's32[1]{0}', space=sflag, size = 0x4, scoped, tag = 'scoped memory for tpu_custom_call.1']
    #allocation10 [shape = 'u8[8192]{0}', space=vmem, size = 0x2000, scoped, tag = 'output window, operand 0']
    %12 = vsyncpa [#allocation3], 0
    %s13 = scalar_lea.sflag [#allocation3], 1
    %14 = vsyncpa %s13, 0
    %15 = vsyncpa [#allocation6], 0
    %16 = vsyncpa [#allocation9], 0
    %17 = vsyncpa [#allocation4], 0
    %s18 = scalar_lea.sflag [#allocation4], 1
    %19 = vsyncpa %s18, 0
    loop: start=0, step=1, limit=4
    $region2: #{tpu_custom_call.1} parent=1 // loop_pre_header
      _
    $region3: #{tpu_custom_call.1} parent=1 // loop_header
      %s21 = sphi 0, %s25
      %p22 = scmp.ge.s32.totalorder %s21, 4
      %s31 = sphi 0, %s33
      %s34 = sphi 0, %s31
      %s35 = sphi 0, %s34
      %s51 = sphi 0, %s35
      %s55 = sphi 0, %s55
      %s57 = sphi 0, %s55
      %s58 = sphi 0, %s57
      %s72 = sphi 0, %s58
      %s76 = sphi 0, %s76
      %s78 = sphi 0, %s76
      %s79 = sphi 0, %s78
      %s93 = sphi 0, %s79
      %s97 = sphi 0, %s97
      %s99 = sphi 0, %s97
      %s100 = sphi 0, %s99
      %s114 = sphi 0, %s100
      %s118 = sphi 0, %s118
      %s120 = sphi 0, %s118
      %s121 = sphi 0, %s120
      %s135 = sphi 0, %s121
      %s139 = sphi 0, %s139
      %s141 = sphi 0, %s139
      %s142 = sphi 0, %s141
      %s156 = sphi 0, %s142
      %s160 = sphi 0, %s160
      %s162 = sphi 0, %s160
      %s163 = sphi 0, %s162
      %s177 = sphi 0, %s163
      %s183 = sphi 0, %s185
      %s186 = sphi 0, %s183
      %s187 = sphi 0, %s186
      %s203 = sphi 0, %s187
    $region4: #{tpu_custom_call.1} parent=1 // loop_header_branch
      %24 = sbr.rel (%p22) target = $region8
    $region5: #{tpu_custom_call.1} parent=1 // loop_body
      %s26 = ssub.s32 %s21, 1
      %s27 = ssub.s32 %s21, 2
      %s28 = sadd.s32 %s21, 1
      %s29 = ssub.s32 %s21, %s28
      %p30 = scmp.eq.s32.totalorder %s29, 0
      %s32 = sadd.s32 %s31, 1
      %s33 = scalar_select %p30, %s31, %s32
      %p36 = pneg %p30
      %p37 = scmp.eq.s32.totalorder %s21, 1
      %p38 = por %p36, %p37
      %p39 = scmp.ne.s32.totalorder %s31, %s34
      %p40 = scmp.eq.s32.totalorder %s21, 0
      %p41 = por %p39, %p40
      %p42 = scmp.ne.s32.totalorder %s31, %s34
      %p43 = scmp.eq.s32.totalorder %s26, 1
      %p44 = por %p42, %p43
      %p45 = scmp.ne.s32.totalorder %s34, %s35
      %p46 = scmp.eq.s32.totalorder %s26, 0
      %p47 = por %p45, %p46
      %p48 = scmp.ne.s32.totalorder %s34, %s35
      %p49 = scmp.eq.s32.totalorder %s27, 1
      %p50 = por %p48, %p49
      %p52 = scmp.ne.s32.totalorder %s35, %s51
      %p53 = scmp.eq.s32.totalorder %s27, 0
      %p54 = por %p52, %p53
      %s56 = sadd.s32 %s55, 1
      %p59 = scmp.eq.s32.totalorder %s21, 1
      %p60 = scmp.ne.s32.totalorder %s55, %s57
      %p61 = scmp.eq.s32.totalorder %s21, 0
      %p62 = por %p60, %p61
      %p63 = scmp.ne.s32.totalorder %s55, %s57
      %p64 = scmp.eq.s32.totalorder %s26, 1
      %p65 = por %p63, %p64
      %p66 = scmp.ne.s32.totalorder %s57, %s58
      %p67 = scmp.eq.s32.totalorder %s26, 0
      %p68 = por %p66, %p67
      %p69 = scmp.ne.s32.totalorder %s57, %s58
      %p70 = scmp.eq.s32.totalorder %s27, 1
      %p71 = por %p69, %p70
      %p73 = scmp.ne.s32.totalorder %s58, %s72
      %p74 = scmp.eq.s32.totalorder %s27, 0
      %p75 = por %p73, %p74
      %s77 = sadd.s32 %s76, 1
      %p80 = scmp.eq.s32.totalorder %s21, 1
      %p81 = scmp.ne.s32.totalorder %s76, %s78
      %p82 = scmp.eq.s32.totalorder %s21, 0
      %p83 = por %p81, %p82
      %p84 = scmp.ne.s32.totalorder %s76, %s78
      %p85 = scmp.eq.s32.totalorder %s26, 1
      %p86 = por %p84, %p85
      %p87 = scmp.ne.s32.totalorder %s78, %s79
      %p88 = scmp.eq.s32.totalorder %s26, 0
      %p89 = por %p87, %p88
      %p90 = scmp.ne.s32.totalorder %s78, %s79
      %p91 = scmp.eq.s32.totalorder %s27, 1
      %p92 = por %p90, %p91
      %p94 = scmp.ne.s32.totalorder %s79, %s93
      %p95 = scmp.eq.s32.totalorder %s27, 0
      %p96 = por %p94, %p95
      %s98 = sadd.s32 %s97, 1
      %p101 = scmp.eq.s32.totalorder %s21, 1
      %p102 = scmp.ne.s32.totalorder %s97, %s99
      %p103 = scmp.eq.s32.totalorder %s21, 0
      %p104 = por %p102, %p103
      %p105 = scmp.ne.s32.totalorder %s97, %s99
      %p106 = scmp.eq.s32.totalorder %s26, 1
      %p107 = por %p105, %p106
      %p108 = scmp.ne.s32.totalorder %s99, %s100
      %p109 = scmp.eq.s32.totalorder %s26, 0
      %p110 = por %p108, %p109
      %p111 = scmp.ne.s32.totalorder %s99, %s100
      %p112 = scmp.eq.s32.totalorder %s27, 1
      %p113 = por %p111, %p112
      %p115 = scmp.ne.s32.totalorder %s100, %s114
      %p116 = scmp.eq.s32.totalorder %s27, 0
      %p117 = por %p115, %p116
      %s119 = sadd.s32 %s118, 1
      %p122 = scmp.eq.s32.totalorder %s21, 1
      %p123 = scmp.ne.s32.totalorder %s118, %s120
      %p124 = scmp.eq.s32.totalorder %s21, 0
      %p125 = por %p123, %p124
      %p126 = scmp.ne.s32.totalorder %s118, %s120
      %p127 = scmp.eq.s32.totalorder %s26, 1
      %p128 = por %p126, %p127
      %p129 = scmp.ne.s32.totalorder %s120, %s121
      %p130 = scmp.eq.s32.totalorder %s26, 0
      %p131 = por %p129, %p130
      %p132 = scmp.ne.s32.totalorder %s120, %s121
      %p133 = scmp.eq.s32.totalorder %s27, 1
      %p134 = por %p132, %p133
      %p136 = scmp.ne.s32.totalorder %s121, %s135
      %p137 = scmp.eq.s32.totalorder %s27, 0
      %p138 = por %p136, %p137
      %s140 = sadd.s32 %s139, 1
      %p143 = scmp.eq.s32.totalorder %s21, 1
      %p144 = scmp.ne.s32.totalorder %s139, %s141
      %p145 = scmp.eq.s32.totalorder %s21, 0
      %p146 = por %p144, %p145
      %p147 = scmp.ne.s32.totalorder %s139, %s141
      %p148 = scmp.eq.s32.totalorder %s26, 1
      %p149 = por %p147, %p148
      %p150 = scmp.ne.s32.totalorder %s141, %s142
      %p151 = scmp.eq.s32.totalorder %s26, 0
      %p152 = por %p150, %p151
      %p153 = scmp.ne.s32.totalorder %s141, %s142
      %p154 = scmp.eq.s32.totalorder %s27, 1
      %p155 = por %p153, %p154
      %p157 = scmp.ne.s32.totalorder %s142, %s156
      %p158 = scmp.eq.s32.totalorder %s27, 0
      %p159 = por %p157, %p158
      %s161 = sadd.s32 %s160, 1
      %p164 = scmp.eq.s32.totalorder %s21, 1
      %p165 = scmp.ne.s32.totalorder %s160, %s162
      %p166 = scmp.eq.s32.totalorder %s21, 0
      %p167 = por %p165, %p166
      %p168 = scmp.ne.s32.totalorder %s160, %s162
      %p169 = scmp.eq.s32.totalorder %s26, 1
      %p170 = por %p168, %p169
      %p171 = scmp.ne.s32.totalorder %s162, %s163
      %p172 = scmp.eq.s32.totalorder %s26, 0
      %p173 = por %p171, %p172
      %p174 = scmp.ne.s32.totalorder %s162, %s163
      %p175 = scmp.eq.s32.totalorder %s27, 1
      %p176 = por %p174, %p175
      %p178 = scmp.ne.s32.totalorder %s163, %s177
      %p179 = scmp.eq.s32.totalorder %s27, 0
      %p180 = por %p178, %p179
      %s181 = ssub.s32 %s21, %s28
      %p182 = scmp.eq.s32.totalorder %s181, 0
      %s184 = sadd.s32 %s183, 1
      %s185 = scalar_select %p182, %s183, %s184
      %p188 = pneg %p182
      %p189 = scmp.eq.s32.totalorder %s21, 1
      %p190 = por %p188, %p189
      %p191 = scmp.ne.s32.totalorder %s183, %s186
      %p192 = scmp.eq.s32.totalorder %s21, 0
      %p193 = por %p191, %p192
      %p194 = scmp.ne.s32.totalorder %s183, %s186
      %p195 = scmp.eq.s32.totalorder %s26, 1
      %p196 = por %p194, %p195
      %p197 = scmp.ne.s32.totalorder %s186, %s187
      %p198 = scmp.eq.s32.totalorder %s26, 0
      %p199 = por %p197, %p198
      %p200 = scmp.ne.s32.totalorder %s186, %s187
      %p201 = scmp.eq.s32.totalorder %s27, 1
      %p202 = por %p200, %p201
      %p204 = scmp.ne.s32.totalorder %s187, %s203
      %p205 = scmp.eq.s32.totalorder %s27, 0
      %p206 = por %p204, %p205
      %p207 = scmp.le.s32.totalorder 1, %s21
      %p208 = scmp.lt.s32.totalorder %s21, 3
      %p209 = pnand %p207, %p208
      %p210 = pneg %p209
      // Predicated region
      $region9: #{tpu_custom_call.1} parent=5 // pred_check
        _
      $region10: #{tpu_custom_call.1} parent=5 // pred_check_branch
        %212 = sbr.rel (%p209) target = $region12
      $region11: #{tpu_custom_call.1} parent=5 // pred_region
        %s213 = ssub.s32 %s21, 1
        // Predicated region
        $region13: #{tpu_custom_call.1} parent=11 // pred_check
          %p214 = pneg %p68
        $region14: #{tpu_custom_call.1} parent=11 // pred_check_branch
          %216 = sbr.rel (%p214) target = $region16
        $region15: #{tpu_custom_call.1} parent=11 // pred_region
          %s218 = ssub.s32 7168, 7168
          %219 = vsyncadd [#allocation6], %s218
          %s220 = sshll.u32 [#allocation5], 4
          %s221 = int_to_ptr.vmem [resolvable:$true] %s220
          %226 = dma.hbm_to_vmem [thread:$0]  %s1, 7168, %s221, [#allocation6], 64, 64, 4
        $region16: #{tpu_custom_call.1} parent=11 // pred_fallthru
          _
        // Predicated region
        $region17: #{tpu_custom_call.1} parent=11 // pred_check
          %p227 = pneg %p89
        $region18: #{tpu_custom_call.1} parent=11 // pred_check_branch
          %229 = sbr.rel (%p227) target = $region20
        $region19: #{tpu_custom_call.1} parent=11 // pred_region
          _
        $region20: #{tpu_custom_call.1} parent=11 // pred_fallthru
          _
        // Predicated region
        $region21: #{tpu_custom_call.1} parent=11 // pred_check
          %p230 = pneg %p110
        $region22: #{tpu_custom_call.1} parent=11 // pred_check_branch
          %232 = sbr.rel (%p230) target = $region24
        $region23: #{tpu_custom_call.1} parent=11 // pred_region
          %s234 = ssub.s32 1024, 1024
          %235 = vsyncadd [#allocation6], %s234
          %s236 = sshll.u32 [#allocation7], 4
          %s237 = int_to_ptr.vmem [resolvable:$true] %s236
          %242 = dma.hbm_to_vmem [thread:$0]  %s3, 1024, %s237, [#allocation6], 64, 64, 4
        $region24: #{tpu_custom_call.1} parent=11 // pred_fallthru
          _
        // Predicated region
        $region25: #{tpu_custom_call.1} parent=11 // pred_check
          %p243 = pneg %p131
        $region26: #{tpu_custom_call.1} parent=11 // pred_check_branch
          %245 = sbr.rel (%p243) target = $region28
        $region27: #{tpu_custom_call.1} parent=11 // pred_region
          _
        $region28: #{tpu_custom_call.1} parent=11 // pred_fallthru
          _
        // Predicated region
        $region29: #{tpu_custom_call.1} parent=11 // pred_check
          %p246 = pneg %p152
        $region30: #{tpu_custom_call.1} parent=11 // pred_check_branch
          %248 = sbr.rel (%p246) target = $region32
        $region31: #{tpu_custom_call.1} parent=11 // pred_region
          %s250 = ssub.s32 1024, 1024
          %251 = vsyncadd [#allocation9], %s250
          %s252 = sshll.u32 [#allocation8], 4
          %s253 = int_to_ptr.vmem [resolvable:$true] %s252
          %258 = dma.hbm_to_vmem [thread:$0]  %s5, 1024, %s253, [#allocation9], 64, 64, 4
        $region32: #{tpu_custom_call.1} parent=11 // pred_fallthru
          _
        // Predicated region
        $region33: #{tpu_custom_call.1} parent=11 // pred_check
          %p259 = pneg %p173
        $region34: #{tpu_custom_call.1} parent=11 // pred_check_branch
          %261 = sbr.rel (%p259) target = $region36
        $region35: #{tpu_custom_call.1} parent=11 // pred_region
          _
        $region36: #{tpu_custom_call.1} parent=11 // pred_fallthru
          _
      $region12: #{tpu_custom_call.1} parent=5 // pred_fallthru
        _
      %p262 = scmp.lt.s32.totalorder %s21, 2
      // Predicated region
      $region37: #{tpu_custom_call.1} parent=5 // pred_check
        %p263 = pneg %p262
      $region38: #{tpu_custom_call.1} parent=5 // pred_check_branch
        %265 = sbr.rel (%p263) target = $region40
      $region39: #{tpu_custom_call.1} parent=5 // pred_region
        // Predicated region
        $region41: #{tpu_custom_call.1} parent=39 // pred_check
          %p266 = pneg %p41
        $region42: #{tpu_custom_call.1} parent=39 // pred_check_branch
          %268 = sbr.rel (%p266) target = $region44
        $region43: #{tpu_custom_call.1} parent=39 // pred_region
          %s269 = sand.u32 %s31, 1
          %s270 = scalar_lea.sflag [#allocation3], %s269
          %s271 = sand.u32 %s31, 1
          %s272 = smul.addr %s271, 56
          %s273 = scalar_lea.vmem [#allocation2], %s272
          %s275 = ssub.s32 896, 896
          %276 = vsyncadd %s270, %s275
          %s277 = smul.addr %s21, 7
          %s278 = smul.addr %s277, 128
          %s279 = scalar_lea.hbm %s0, %s278
          %s281 = sshll.u32 %s273, 4
          %s282 = int_to_ptr.vmem [resolvable:$true] %s281
          %284 = dma.hbm_to_vmem [thread:$0]  %s279, 896, %s282, %s270
        $region44: #{tpu_custom_call.1} parent=39 // pred_fallthru
          _
      $region40: #{tpu_custom_call.1} parent=5 // pred_fallthru
        _
      %p285 = scmp.le.s32.totalorder 1, %s21
      %p286 = scmp.lt.s32.totalorder %s21, 3
      %p287 = pnand %p285, %p286
      %p288 = pneg %p287
      // Predicated region
      $region45: #{tpu_custom_call.1} parent=5 // pred_check
        _
      $region46: #{tpu_custom_call.1} parent=5 // pred_check_branch
        %290 = sbr.rel (%p287) target = $region48
      $region47: #{tpu_custom_call.1} parent=5 // pred_region
        %s291 = ssub.s32 %s21, 1
        %s292 = sand.u32 %s34, 1
        %s293 = scalar_lea.sflag [#allocation3], %s292
        %s294 = sand.u32 %s34, 1
        %s295 = smul.addr %s294, 56
        %s296 = scalar_lea.vmem [#allocation2], %s295
        // Predicated region
        $region49: #{tpu_custom_call.1} parent=47 // pred_check
          %p297 = pneg %p47
        $region50: #{tpu_custom_call.1} parent=47 // pred_check_branch
          %299 = sbr.rel (%p297) target = $region52
        $region51: #{tpu_custom_call.1} parent=47 // pred_region
          %300 = dma.done %s293, 896
        $region52: #{tpu_custom_call.1} parent=47 // pred_fallthru
          _
        // Predicated region
        $region53: #{tpu_custom_call.1} parent=47 // pred_check
          %p301 = pneg %p68
        $region54: #{tpu_custom_call.1} parent=47 // pred_check_branch
          %303 = sbr.rel (%p301) target = $region56
        $region55: #{tpu_custom_call.1} parent=47 // pred_region
          %304 = dma.done [#allocation6], 7168
        $region56: #{tpu_custom_call.1} parent=47 // pred_fallthru
          _
        // Predicated region
        $region57: #{tpu_custom_call.1} parent=47 // pred_check
          %p305 = pneg %p110
        $region58: #{tpu_custom_call.1} parent=47 // pred_check_branch
          %307 = sbr.rel (%p305) target = $region60
        $region59: #{tpu_custom_call.1} parent=47 // pred_region
          %308 = dma.done [#allocation6], 1024
        $region60: #{tpu_custom_call.1} parent=47 // pred_fallthru
          _
        // Predicated region
        $region61: #{tpu_custom_call.1} parent=47 // pred_check
          %p309 = pneg %p152
        $region62: #{tpu_custom_call.1} parent=47 // pred_check_branch
          %311 = sbr.rel (%p309) target = $region64
        $region63: #{tpu_custom_call.1} parent=47 // pred_region
          %312 = dma.done [#allocation9], 1024
        $region64: #{tpu_custom_call.1} parent=47 // pred_fallthru
          _
        %s313 = sand.u32 %s34, 1
        %s314 = scalar_lea.sflag [#allocation3], %s313
        %s315 = sand.u32 %s34, 1
        %s316 = smul.addr %s315, 56
        %s317 = scalar_lea.vmem [#allocation2], %s316
        %p318 = pneg %p47
        %p319 = pneg %p44
        %p320 = pneg %p68
        %p321 = pneg %p65
        %p322 = pneg %p89
        %p323 = pneg %p86
        %p324 = pneg %p110
        %p325 = pneg %p107
        %p326 = pneg %p131
        %p327 = pneg %p128
        %p328 = pneg %p152
        %p329 = pneg %p149
        %p330 = pneg %p173
        %p331 = pneg %p170
        %p332 = pneg %p199
        %p333 = pneg %p196
        %s334 = sand.u32 %s186, 1
        %s335 = scalar_lea.sflag [#allocation4], %s334
        %s336 = sand.u32 %s186, 1
        %s337 = smul.addr %s336, 8
        %s338 = scalar_lea.vmem [#allocation10], %s337
        %v340 = vld [vmem:[%s296] sm:$0xff]
        %v341 = vld [vmem:[%s296 + $0x8] sm:$0xff]
        %v342 = vld [vmem:[%s296 + $0x10] sm:$0xff]
        %v343 = vld [vmem:[%s296 + $0x18] sm:$0xff]
        %v344 = vld [vmem:[%s296 + $0x20] sm:$0xff]
        %v345 = vld [vmem:[%s296 + $0x28] sm:$0xff]
        %v346 = vld [vmem:[%s296 + $0x30] sm:$0xff]
        %v347 = vpack.c.bf16 %v340, %v340
        %v348 = vpack.c.bf16 %v341, %v341
        %v349 = vpack.c.bf16 %v342, %v342
        %v350 = vpack.c.bf16 %v343, %v343
        %v351 = vpack.c.bf16 %v344, %v344
        %v352 = vpack.c.bf16 %v345, %v345
        %v353 = vpack.c.bf16 %v346, %v346
        %v354 = vld [vmem:[#allocation5] sm:$0xf]
        %v355 = vld [vmem:[#allocation5 + $0x4] sm:$0xf]
        %v356 = vld [vmem:[#allocation5 + $0x8] sm:$0xf]
        %v357 = vld [vmem:[#allocation5 + $0xc] sm:$0xf]
        %v358 = vld [vmem:[#allocation5 + $0x10] sm:$0xf]
        %v359 = vld [vmem:[#allocation5 + $0x14] sm:$0xf]
        %v360 = vld [vmem:[#allocation5 + $0x18] sm:$0xf]
        %v361 = vld [vmem:[#allocation5 + $0x1c] sm:$0xf]
        %v362 = vld [vmem:[#allocation5 + $0x20] sm:$0xf]
        %v363 = vld [vmem:[#allocation5 + $0x24] sm:$0xf]
        %v364 = vld [vmem:[#allocation5 + $0x28] sm:$0xf]
        %v365 = vld [vmem:[#allocation5 + $0x2c] sm:$0xf]
        %v366 = vld [vmem:[#allocation5 + $0x30] sm:$0xf]
        %v367 = vld [vmem:[#allocation5 + $0x34] sm:$0xf]
        %v368 = vld [vmem:[#allocation5 + $0x38] sm:$0xf]
        %v369 = vld [vmem:[#allocation5 + $0x3c] sm:$0xf]
        %v370 = vld [vmem:[#allocation5 + $0x40] sm:$0xf]
        %v371 = vld [vmem:[#allocation5 + $0x44] sm:$0xf]
        %v372 = vld [vmem:[#allocation5 + $0x48] sm:$0xf]
        %v373 = vld [vmem:[#allocation5 + $0x4c] sm:$0xf]
        %v374 = vld [vmem:[#allocation5 + $0x50] sm:$0xf]
        %v375 = vld [vmem:[#allocation5 + $0x54] sm:$0xf]
        %v376 = vld [vmem:[#allocation5 + $0x58] sm:$0xf]
        %v377 = vld [vmem:[#allocation5 + $0x5c] sm:$0xf]
        %v378 = vld [vmem:[#allocation5 + $0x60] sm:$0xf]
        %v379 = vld [vmem:[#allocation5 + $0x64] sm:$0xf]
        %v380 = vld [vmem:[#allocation5 + $0x68] sm:$0xf]
        %v381 = vld [vmem:[#allocation5 + $0x6c] sm:$0xf]
        %v382 = vld [vmem:[#allocation5 + $0x70] sm:$0xf]
        %v383 = vld [vmem:[#allocation5 + $0x74] sm:$0xf]
        %v384 = vld [vmem:[#allocation5 + $0x78] sm:$0xf]
        %v385 = vld [vmem:[#allocation5 + $0x7c] sm:$0xf]
        %v386 = vld [vmem:[#allocation5 + $0x80] sm:$0xf]
        %v387 = vld [vmem:[#allocation5 + $0x84] sm:$0xf]
        %v388 = vld [vmem:[#allocation5 + $0x88] sm:$0xf]
        %v389 = vld [vmem:[#allocation5 + $0x8c] sm:$0xf]
        %v390 = vld [vmem:[#allocation5 + $0x90] sm:$0xf]
        %v391 = vld [vmem:[#allocation5 + $0x94] sm:$0xf]
        %v392 = vld [vmem:[#allocation5 + $0x98] sm:$0xf]
        %v393 = vld [vmem:[#allocation5 + $0x9c] sm:$0xf]
        %v394 = vld [vmem:[#allocation5 + $0xa0] sm:$0xf]
        %v395 = vld [vmem:[#allocation5 + $0xa4] sm:$0xf]
        %v396 = vld [vmem:[#allocation5 + $0xa8] sm:$0xf]
        %v397 = vld [vmem:[#allocation5 + $0xac] sm:$0xf]
        %v398 = vld [vmem:[#allocation5 + $0xb0] sm:$0xf]
        %v399 = vld [vmem:[#allocation5 + $0xb4] sm:$0xf]
        %v400 = vld [vmem:[#allocation5 + $0xb8] sm:$0xf]
        %v401 = vld [vmem:[#allocation5 + $0xbc] sm:$0xf]
        %v402 = vld [vmem:[#allocation5 + $0xc0] sm:$0xf]
        %v403 = vld [vmem:[#allocation5 + $0xc4] sm:$0xf]
        %v404 = vld [vmem:[#allocation5 + $0xc8] sm:$0xf]
        %v405 = vld [vmem:[#allocation5 + $0xcc] sm:$0xf]
        %v406 = vld [vmem:[#allocation5 + $0xd0] sm:$0xf]
        %v407 = vld [vmem:[#allocation5 + $0xd4] sm:$0xf]
        %v408 = vld [vmem:[#allocation5 + $0xd8] sm:$0xf]
        %v409 = vld [vmem:[#allocation5 + $0xdc] sm:$0xf]
        %v410 = vld [vmem:[#allocation5 + $0xe0] sm:$0xf]
        %v411 = vld [vmem:[#allocation5 + $0xe4] sm:$0xf]
        %v412 = vld [vmem:[#allocation5 + $0xe8] sm:$0xf]
        %v413 = vld [vmem:[#allocation5 + $0xec] sm:$0xf]
        %v414 = vld [vmem:[#allocation5 + $0xf0] sm:$0xf]
        %v415 = vld [vmem:[#allocation5 + $0xf4] sm:$0xf]
        %v416 = vld [vmem:[#allocation5 + $0xf8] sm:$0xf]
        %v417 = vld [vmem:[#allocation5 + $0xfc] sm:$0xf]
        %v418 = vld [vmem:[#allocation5 + $0x100] sm:$0xf]
        %v419 = vld [vmem:[#allocation5 + $0x104] sm:$0xf]
        %v420 = vld [vmem:[#allocation5 + $0x108] sm:$0xf]
        %v421 = vld [vmem:[#allocation5 + $0x10c] sm:$0xf]
        %v422 = vld [vmem:[#allocation5 + $0x110] sm:$0xf]
        %v423 = vld [vmem:[#allocation5 + $0x114] sm:$0xf]
        %v424 = vld [vmem:[#allocation5 + $0x118] sm:$0xf]
        %v425 = vld [vmem:[#allocation5 + $0x11c] sm:$0xf]
        %v426 = vld [vmem:[#allocation5 + $0x120] sm:$0xf]
        %v427 = vld [vmem:[#allocation5 + $0x124] sm:$0xf]
        %v428 = vld [vmem:[#allocation5 + $0x128] sm:$0xf]
        %v429 = vld [vmem:[#allocation5 + $0x12c] sm:$0xf]
        %v430 = vld [vmem:[#allocation5 + $0x130] sm:$0xf]
        %v431 = vld [vmem:[#allocation5 + $0x134] sm:$0xf]
        %v432 = vld [vmem:[#allocation5 + $0x138] sm:$0xf]
        %v433 = vld [vmem:[#allocation5 + $0x13c] sm:$0xf]
        %v434 = vld [vmem:[#allocation5 + $0x140] sm:$0xf]
        %v435 = vld [vmem:[#allocation5 + $0x144] sm:$0xf]
        %v436 = vld [vmem:[#allocation5 + $0x148] sm:$0xf]
        %v437 = vld [vmem:[#allocation5 + $0x14c] sm:$0xf]
        %v438 = vld [vmem:[#allocation5 + $0x150] sm:$0xf]
        %v439 = vld [vmem:[#allocation5 + $0x154] sm:$0xf]
        %v440 = vld [vmem:[#allocation5 + $0x158] sm:$0xf]
        %v441 = vld [vmem:[#allocation5 + $0x15c] sm:$0xf]
        %v442 = vld [vmem:[#allocation5 + $0x160] sm:$0xf]
        %v443 = vld [vmem:[#allocation5 + $0x164] sm:$0xf]
        %v444 = vld [vmem:[#allocation5 + $0x168] sm:$0xf]
        %v445 = vld [vmem:[#allocation5 + $0x16c] sm:$0xf]
        %v446 = vld [vmem:[#allocation5 + $0x170] sm:$0xf]
        %v447 = vld [vmem:[#allocation5 + $0x174] sm:$0xf]
        %v448 = vld [vmem:[#allocation5 + $0x178] sm:$0xf]
        %v449 = vld [vmem:[#allocation5 + $0x17c] sm:$0xf]
        %v450 = vld [vmem:[#allocation5 + $0x180] sm:$0xf]
        %v451 = vld [vmem:[#allocation5 + $0x184] sm:$0xf]
        %v452 = vld [vmem:[#allocation5 + $0x188] sm:$0xf]
        %v453 = vld [vmem:[#allocation5 + $0x18c] sm:$0xf]
        %v454 = vld [vmem:[#allocation5 + $0x190] sm:$0xf]
        %v455 = vld [vmem:[#allocation5 + $0x194] sm:$0xf]
        %v456 = vld [vmem:[#allocation5 + $0x198] sm:$0xf]
        %v457 = vld [vmem:[#allocation5 + $0x19c] sm:$0xf]
        %v458 = vld [vmem:[#allocation5 + $0x1a0] sm:$0xf]
        %v459 = vld [vmem:[#allocation5 + $0x1a4] sm:$0xf]
        %v460 = vld [vmem:[#allocation5 + $0x1a8] sm:$0xf]
        %v461 = vld [vmem:[#allocation5 + $0x1ac] sm:$0xf]
        %v462 = vld [vmem:[#allocation5 + $0x1b0] sm:$0xf]
        %v463 = vld [vmem:[#allocation5 + $0x1b4] sm:$0xf]
        %v464 = vld [vmem:[#allocation5 + $0x1b8] sm:$0xf]
        %v465 = vld [vmem:[#allocation5 + $0x1bc] sm:$0xf]
        %v466 = vld [vmem:[%s2] sm:$0x1]
        %v468 = vlaneseq
        %v469 = vshrl.u32 %v468, 7
        %v470 = vsub.s32 0, %v469
        %v471 = vrot.slane %v466, %v470
        %v585 = vunpack.c.l.b16 %v354
        %v586 = vunpack.c.l.b16 %v355
        %v587 = vunpack.c.l.b16 %v356
        %v588 = vunpack.c.l.b16 %v357
        %v589 = vunpack.c.l.b16 %v358
        %v590 = vunpack.c.l.b16 %v359
        %v591 = vunpack.c.l.b16 %v360
        %v592 = vunpack.c.l.b16 %v361
        %v593 = vunpack.c.l.b16 %v362
        %v594 = vunpack.c.l.b16 %v363
        %v595 = vunpack.c.l.b16 %v364
        %v596 = vunpack.c.l.b16 %v365
        %v597 = vunpack.c.l.b16 %v366
        %v598 = vunpack.c.l.b16 %v367
        %v599 = vunpack.c.l.b16 %v368
        %v600 = vunpack.c.l.b16 %v369
        %v601 = vunpack.c.l.b16 %v370
        %v602 = vunpack.c.l.b16 %v371
        %v603 = vunpack.c.l.b16 %v372
        %v604 = vunpack.c.l.b16 %v373
        %v605 = vunpack.c.l.b16 %v374
        %v606 = vunpack.c.l.b16 %v375
        %v607 = vunpack.c.l.b16 %v376
        %v608 = vunpack.c.l.b16 %v377
        %v609 = vunpack.c.l.b16 %v378
        %v610 = vunpack.c.l.b16 %v379
        %v611 = vunpack.c.l.b16 %v380
        %v612 = vunpack.c.l.b16 %v381
        %v613 = vunpack.c.l.b16 %v382
        %v614 = vunpack.c.l.b16 %v383
        %v615 = vunpack.c.l.b16 %v384
        %v616 = vunpack.c.l.b16 %v385
        %v617 = vunpack.c.l.b16 %v386
        %v618 = vunpack.c.l.b16 %v387
        %v619 = vunpack.c.l.b16 %v388
        %v620 = vunpack.c.l.b16 %v389
        %v621 = vunpack.c.l.b16 %v390
        %v622 = vunpack.c.l.b16 %v391
        %v623 = vunpack.c.l.b16 %v392
        %v624 = vunpack.c.l.b16 %v393
        %v625 = vunpack.c.l.b16 %v394
        %v626 = vunpack.c.l.b16 %v395
        %v627 = vunpack.c.l.b16 %v396
        %v628 = vunpack.c.l.b16 %v397
        %v629 = vunpack.c.l.b16 %v398
        %v630 = vunpack.c.l.b16 %v399
        %v631 = vunpack.c.l.b16 %v400
        %v632 = vunpack.c.l.b16 %v401
        %v633 = vunpack.c.l.b16 %v402
        %v634 = vunpack.c.l.b16 %v403
        %v635 = vunpack.c.l.b16 %v404
        %v636 = vunpack.c.l.b16 %v405
        %v637 = vunpack.c.l.b16 %v406
        %v638 = vunpack.c.l.b16 %v407
        %v639 = vunpack.c.l.b16 %v408
        %v640 = vunpack.c.l.b16 %v409
        %v641 = vunpack.c.l.b16 %v410
        %v642 = vunpack.c.l.b16 %v411
        %v643 = vunpack.c.l.b16 %v412
        %v644 = vunpack.c.l.b16 %v413
        %v645 = vunpack.c.l.b16 %v414
        %v646 = vunpack.c.l.b16 %v415
        %v647 = vunpack.c.l.b16 %v416
        %v648 = vunpack.c.l.b16 %v417
        %v649 = vunpack.c.l.b16 %v418
        %v650 = vunpack.c.l.b16 %v419
        %v651 = vunpack.c.l.b16 %v420
        %v652 = vunpack.c.l.b16 %v421
        %v653 = vunpack.c.l.b16 %v422
        %v654 = vunpack.c.l.b16 %v423
        %v655 = vunpack.c.l.b16 %v424
        %v656 = vunpack.c.l.b16 %v425
        %v657 = vunpack.c.l.b16 %v426
        %v658 = vunpack.c.l.b16 %v427
        %v659 = vunpack.c.l.b16 %v428
        %v660 = vunpack.c.l.b16 %v429
        %v661 = vunpack.c.l.b16 %v430
        %v662 = vunpack.c.l.b16 %v431
        %v663 = vunpack.c.l.b16 %v432
        %v664 = vunpack.c.l.b16 %v433
        %v665 = vunpack.c.l.b16 %v434
        %v666 = vunpack.c.l.b16 %v435
        %v667 = vunpack.c.l.b16 %v436
        %v668 = vunpack.c.l.b16 %v437
        %v669 = vunpack.c.l.b16 %v438
        %v670 = vunpack.c.l.b16 %v439
        %v671 = vunpack.c.l.b16 %v440
        %v672 = vunpack.c.l.b16 %v441
        %v673 = vunpack.c.l.b16 %v442
        %v674 = vunpack.c.l.b16 %v443
        %v675 = vunpack.c.l.b16 %v444
        %v676 = vunpack.c.l.b16 %v445
        %v677 = vunpack.c.l.b16 %v446
        %v678 = vunpack.c.l.b16 %v447
        %v679 = vunpack.c.l.b16 %v448
        %v680 = vunpack.c.l.b16 %v449
        %v681 = vunpack.c.l.b16 %v450
        %v682 = vunpack.c.l.b16 %v451
        %v683 = vunpack.c.l.b16 %v452
        %v684 = vunpack.c.l.b16 %v453
        %v685 = vunpack.c.l.b16 %v454
        %v686 = vunpack.c.l.b16 %v455
        %v687 = vunpack.c.l.b16 %v456
        %v688 = vunpack.c.l.b16 %v457
        %v689 = vunpack.c.l.b16 %v458
        %v690 = vunpack.c.l.b16 %v459
        %v691 = vunpack.c.l.b16 %v460
        %v692 = vunpack.c.l.b16 %v461
        %v693 = vunpack.c.l.b16 %v462
        %v694 = vunpack.c.l.b16 %v463
        %v695 = vunpack.c.l.b16 %v464
        %v696 = vunpack.c.l.b16 %v465
        %v697 = vpack.c.b16 %v586, %v585
        %v698 = vpack.c.b16 %v588, %v587
        %v699 = vpack.c.b16 %v590, %v589
        %v700 = vpack.c.b16 %v592, %v591
        %v701 = vpack.c.b16 %v594, %v593
        %v702 = vpack.c.b16 %v596, %v595
        %v703 = vpack.c.b16 %v598, %v597
        %v704 = vpack.c.b16 %v600, %v599
        %v705 = vpack.c.b16 %v602, %v601
        %v706 = vpack.c.b16 %v604, %v603
        %v707 = vpack.c.b16 %v606, %v605
        %v708 = vpack.c.b16 %v608, %v607
        %v709 = vpack.c.b16 %v610, %v609
        %v710 = vpack.c.b16 %v612, %v611
        %v711 = vpack.c.b16 %v614, %v613
        %v712 = vpack.c.b16 %v616, %v615
        %v713 = vpack.c.b16 %v618, %v617
        %v714 = vpack.c.b16 %v620, %v619
        %v715 = vpack.c.b16 %v622, %v621
        %v716 = vpack.c.b16 %v624, %v623
        %v717 = vpack.c.b16 %v626, %v625
        %v718 = vpack.c.b16 %v628, %v627
        %v719 = vpack.c.b16 %v630, %v629
        %v720 = vpack.c.b16 %v632, %v631
        %v721 = vpack.c.b16 %v634, %v633
        %v722 = vpack.c.b16 %v636, %v635
        %v723 = vpack.c.b16 %v638, %v637
        %v724 = vpack.c.b16 %v640, %v639
        %v725 = vpack.c.b16 %v642, %v641
        %v726 = vpack.c.b16 %v644, %v643
        %v727 = vpack.c.b16 %v646, %v645
        %v728 = vpack.c.b16 %v648, %v647
        %v729 = vpack.c.b16 %v650, %v649
        %v730 = vpack.c.b16 %v652, %v651
        %v731 = vpack.c.b16 %v654, %v653
        %v732 = vpack.c.b16 %v656, %v655
        %v733 = vpack.c.b16 %v658, %v657
        %v734 = vpack.c.b16 %v660, %v659
        %v735 = vpack.c.b16 %v662, %v661
        %v736 = vpack.c.b16 %v664, %v663
        %v737 = vpack.c.b16 %v666, %v665
        %v738 = vpack.c.b16 %v668, %v667
        %v739 = vpack.c.b16 %v670, %v669
        %v740 = vpack.c.b16 %v672, %v671
        %v741 = vpack.c.b16 %v674, %v673
        %v742 = vpack.c.b16 %v676, %v675
        %v743 = vpack.c.b16 %v678, %v677
        %v744 = vpack.c.b16 %v680, %v679
        %v745 = vpack.c.b16 %v682, %v681
        %v746 = vpack.c.b16 %v684, %v683
        %v747 = vpack.c.b16 %v686, %v685
        %v748 = vpack.c.b16 %v688, %v687
        %v749 = vpack.c.b16 %v690, %v689
        %v750 = vpack.c.b16 %v692, %v691
        %v751 = vpack.c.b16 %v694, %v693
        %v752 = vpack.c.b16 %v696, %v695
        %809 = vmatprep.subr.bf16.mxu0 0
        %810 = vmatpush1.bf16.msra.mxu0 %v697
        %811 = vmatprep.subr.bf16.mxu0 0
        %812 = vmatpush1.bf16.msra.mxu0 %v698
        %813 = vmatprep.subr.bf16.mxu0 0
        %814 = vmatpush1.bf16.msra.mxu0 %v699
        %815 = vmatprep.subr.bf16.mxu0 0
        %816 = vmatpush1.bf16.msra.mxu0 %v700
        %817 = vmatprep.subr.bf16.mxu0 0
        %818 = vmatpush1.bf16.msra.mxu0 %v701
        %819 = vmatprep.subr.bf16.mxu0 0
        %820 = vmatpush1.bf16.msra.mxu0 %v702
        %821 = vmatprep.subr.bf16.mxu0 0
        %822 = vmatpush1.bf16.msra.mxu0 %v703
        %823 = vmatprep.subr.bf16.mxu0 0
        %824 = vmatpush1.bf16.msra.mxu0 %v704
        %825 = vmatprep.subr.bf16.mxu0 0
        %826 = vmatpush1.bf16.msra.mxu0 %v705
        %827 = vmatprep.subr.bf16.mxu0 0
        %828 = vmatpush1.bf16.msra.mxu0 %v706
        %829 = vmatprep.subr.bf16.mxu0 0
        %830 = vmatpush1.bf16.msra.mxu0 %v707
        %831 = vmatprep.subr.bf16.mxu0 0
        %832 = vmatpush1.bf16.msra.mxu0 %v708
        %833 = vmatprep.subr.bf16.mxu0 0
        %834 = vmatpush1.bf16.msra.mxu0 %v709
        %835 = vmatprep.subr.bf16.mxu0 0
        %836 = vmatpush1.bf16.msra.mxu0 %v710
        %837 = vmatprep.subr.bf16.mxu0 0
        %838 = vmatpush1.bf16.msra.mxu0 %v711
        %839 = vmatprep.subr.bf16.mxu0 0
        %840 = vmatpush1.bf16.msra.mxu0 %v712
        %841 = vmatprep.mubr.bf16.mxu0 %v348
        %842 = vmatmul.mubr.bf16.gmra.mrb[0].mxu0 %v347
        %v843 = vpop.f32.mrb[0].mxu0
        %v844 = vadd.f32 %v471, %v843
        %v845 = vpop.f32.mrb[0].mxu0
        %v846 = vpop.f32.mrb[0].mxu0
        %v847 = vpop.f32.mrb[0].mxu0
        %848 = vdwg.mxu0
        %849 = vmatprep.subr.bf16.mxu0 0
        %850 = vmatpush1.bf16.msra.mxu0 %v713
        %851 = vmatprep.subr.bf16.mxu0 0
        %852 = vmatpush1.bf16.msra.mxu0 %v714
        %853 = vmatprep.subr.bf16.mxu0 0
        %854 = vmatpush1.bf16.msra.mxu0 %v715
        %855 = vmatprep.subr.bf16.mxu0 0
        %856 = vmatpush1.bf16.msra.mxu0 %v716
        %857 = vmatprep.subr.bf16.mxu0 0
        %858 = vmatpush1.bf16.msra.mxu0 %v717
        %859 = vmatprep.subr.bf16.mxu0 0
        %860 = vmatpush1.bf16.msra.mxu0 %v718
        %861 = vmatprep.subr.bf16.mxu0 0
        %862 = vmatpush1.bf16.msra.mxu0 %v719
        %863 = vmatprep.subr.bf16.mxu0 0
        %864 = vmatpush1.bf16.msra.mxu0 %v720
        %865 = vmatprep.subr.bf16.mxu0 0
        %866 = vmatpush1.bf16.msra.mxu0 %v721
        %867 = vmatprep.subr.bf16.mxu0 0
        %868 = vmatpush1.bf16.msra.mxu0 %v722
        %869 = vmatprep.subr.bf16.mxu0 0
        %870 = vmatpush1.bf16.msra.mxu0 %v723
        %871 = vmatprep.subr.bf16.mxu0 0
        %872 = vmatpush1.bf16.msra.mxu0 %v724
        %873 = vmatprep.subr.bf16.mxu0 0
        %874 = vmatpush1.bf16.msra.mxu0 %v725
        %875 = vmatprep.subr.bf16.mxu0 0
        %876 = vmatpush1.bf16.msra.mxu0 %v726
        %877 = vmatprep.subr.bf16.mxu0 0
        %878 = vmatpush1.bf16.msra.mxu0 %v727
        %879 = vmatprep.subr.bf16.mxu0 0
        %880 = vmatpush1.bf16.msra.mxu0 %v728
        %881 = vmatprep.mubr.bf16.mxu0 %v350
        %882 = vmatmul.mubr.bf16.gmra.mrb[0].mxu0 %v349
        %v883 = vpop.f32.mrb[0].mxu0
        %v884 = vadd.f32 %v844, %v883
        %v885 = vpop.f32.mrb[0].mxu0
        %v886 = vpop.f32.mrb[0].mxu0
        %v887 = vpop.f32.mrb[0].mxu0
        %888 = vdwg.mxu0
        %889 = vmatprep.subr.bf16.mxu0 0
        %890 = vmatpush1.bf16.msra.mxu0 %v729
        %891 = vmatprep.subr.bf16.mxu0 0
        %892 = vmatpush1.bf16.msra.mxu0 %v730
        %893 = vmatprep.subr.bf16.mxu0 0
        %894 = vmatpush1.bf16.msra.mxu0 %v731
        %895 = vmatprep.subr.bf16.mxu0 0
        %896 = vmatpush1.bf16.msra.mxu0 %v732
        %897 = vmatprep.subr.bf16.mxu0 0
        %898 = vmatpush1.bf16.msra.mxu0 %v733
        %899 = vmatprep.subr.bf16.mxu0 0
        %900 = vmatpush1.bf16.msra.mxu0 %v734
        %901 = vmatprep.subr.bf16.mxu0 0
        %902 = vmatpush1.bf16.msra.mxu0 %v735
        %903 = vmatprep.subr.bf16.mxu0 0
        %904 = vmatpush1.bf16.msra.mxu0 %v736
        %905 = vmatprep.subr.bf16.mxu0 0
        %906 = vmatpush1.bf16.msra.mxu0 %v737
        %907 = vmatprep.subr.bf16.mxu0 0
        %908 = vmatpush1.bf16.msra.mxu0 %v738
        %909 = vmatprep.subr.bf16.mxu0 0
        %910 = vmatpush1.bf16.msra.mxu0 %v739
        %911 = vmatprep.subr.bf16.mxu0 0
        %912 = vmatpush1.bf16.msra.mxu0 %v740
        %913 = vmatprep.subr.bf16.mxu0 0
        %914 = vmatpush1.bf16.msra.mxu0 %v741
        %915 = vmatprep.subr.bf16.mxu0 0
        %916 = vmatpush1.bf16.msra.mxu0 %v742
        %917 = vmatprep.subr.bf16.mxu0 0
        %918 = vmatpush1.bf16.msra.mxu0 %v743
        %919 = vmatprep.subr.bf16.mxu0 0
        %920 = vmatpush1.bf16.msra.mxu0 %v744
        %921 = vmatprep.mubr.bf16.mxu0 %v352
        %922 = vmatmul.mubr.bf16.gmra.mrb[0].mxu0 %v351
        %v923 = vpop.f32.mrb[0].mxu0
        %v924 = vadd.f32 %v884, %v923
        %v925 = vpop.f32.mrb[0].mxu0
        %v926 = vpop.f32.mrb[0].mxu0
        %v927 = vpop.f32.mrb[0].mxu0
        %928 = vdwg.mxu0
        %929 = vmatprep.subr.bf16.mxu0 0
        %930 = vmatpush1.bf16.msra.mxu0 %v745
        %931 = vmatprep.subr.bf16.mxu0 0
        %932 = vmatpush1.bf16.msra.mxu0 %v746
        %933 = vmatprep.subr.bf16.mxu0 0
        %934 = vmatpush1.bf16.msra.mxu0 %v747
        %935 = vmatprep.subr.bf16.mxu0 0
        %936 = vmatpush1.bf16.msra.mxu0 %v748
        %937 = vmatprep.subr.bf16.mxu0 0
        %938 = vmatpush1.bf16.msra.mxu0 %v749
        %939 = vmatprep.subr.bf16.mxu0 0
        %940 = vmatpush1.bf16.msra.mxu0 %v750
        %941 = vmatprep.subr.bf16.mxu0 0
        %942 = vmatpush1.bf16.msra.mxu0 %v751
        %943 = vmatprep.subr.bf16.mxu0 0
        %944 = vmatpush1.bf16.msra.mxu0 %v752
        %945 = vmatprep.subr.bf16.mxu0 0
        %946 = vmatpush1.bf16.msra.mxu0 0
        %947 = vmatprep.subr.bf16.mxu0 0
        %948 = vmatpush1.bf16.msra.mxu0 0
        %949 = vmatprep.subr.bf16.mxu0 0
        %950 = vmatpush1.bf16.msra.mxu0 0
        %951 = vmatprep.subr.bf16.mxu0 0
        %952 = vmatpush1.bf16.msra.mxu0 0
        %953 = vmatprep.subr.bf16.mxu0 0
        %954 = vmatpush1.bf16.msra.mxu0 0
        %955 = vmatprep.subr.bf16.mxu0 0
        %956 = vmatpush1.bf16.msra.mxu0 0
        %957 = vmatprep.subr.bf16.mxu0 0
        %958 = vmatpush1.bf16.msra.mxu0 0
        %959 = vmatprep.subr.bf16.mxu0 0
        %960 = vmatpush1.bf16.msra.mxu0 0
        %961 = vmatprep.mubr.bf16.mxu0 0
        %962 = vmatmul.mubr.bf16.gmra.mrb[0].mxu0 %v353
        %v963 = vpop.f32.mrb[0].mxu0
        %v964 = vadd.f32 %v924, %v963
        %v965 = vpop.f32.mrb[0].mxu0
        %v966 = vpop.f32.mrb[0].mxu0
        %v967 = vpop.f32.mrb[0].mxu0
        %968 = vdwg.mxu0
        %v969 = vmax.f32 %v964, 0.0
        %v970 = vpack.c.bf16 %v969, %v969
        %v971 = vld [vmem:[#allocation7] sm:$0xf]
        %v972 = vld [vmem:[#allocation7 + $0x4] sm:$0xf]
        %v973 = vld [vmem:[#allocation7 + $0x8] sm:$0xf]
        %v974 = vld [vmem:[#allocation7 + $0xc] sm:$0xf]
        %v975 = vld [vmem:[#allocation7 + $0x10] sm:$0xf]
        %v976 = vld [vmem:[#allocation7 + $0x14] sm:$0xf]
        %v977 = vld [vmem:[#allocation7 + $0x18] sm:$0xf]
        %v978 = vld [vmem:[#allocation7 + $0x1c] sm:$0xf]
        %v979 = vld [vmem:[#allocation7 + $0x20] sm:$0xf]
        %v980 = vld [vmem:[#allocation7 + $0x24] sm:$0xf]
        %v981 = vld [vmem:[#allocation7 + $0x28] sm:$0xf]
        %v982 = vld [vmem:[#allocation7 + $0x2c] sm:$0xf]
        %v983 = vld [vmem:[#allocation7 + $0x30] sm:$0xf]
        %v984 = vld [vmem:[#allocation7 + $0x34] sm:$0xf]
        %v985 = vld [vmem:[#allocation7 + $0x38] sm:$0xf]
        %v986 = vld [vmem:[#allocation7 + $0x3c] sm:$0xf]
        %v987 = vld [vmem:[%s4] sm:$0x1]
        %v989 = vlaneseq
        %v990 = vshrl.u32 %v989, 7
        %v991 = vsub.s32 0, %v990
        %v992 = vrot.slane %v987, %v991
        %v1010 = vunpack.c.l.b16 %v971
        %v1011 = vunpack.c.l.b16 %v972
        %v1012 = vunpack.c.l.b16 %v973
        %v1013 = vunpack.c.l.b16 %v974
        %v1014 = vunpack.c.l.b16 %v975
        %v1015 = vunpack.c.l.b16 %v976
        %v1016 = vunpack.c.l.b16 %v977
        %v1017 = vunpack.c.l.b16 %v978
        %v1018 = vunpack.c.l.b16 %v979
        %v1019 = vunpack.c.l.b16 %v980
        %v1020 = vunpack.c.l.b16 %v981
        %v1021 = vunpack.c.l.b16 %v982
        %v1022 = vunpack.c.l.b16 %v983
        %v1023 = vunpack.c.l.b16 %v984
        %v1024 = vunpack.c.l.b16 %v985
        %v1025 = vunpack.c.l.b16 %v986
        %v1026 = vpack.c.b16 %v1011, %v1010
        %v1027 = vpack.c.b16 %v1013, %v1012
        %v1028 = vpack.c.b16 %v1015, %v1014
        %v1029 = vpack.c.b16 %v1017, %v1016
        %v1030 = vpack.c.b16 %v1019, %v1018
        %v1031 = vpack.c.b16 %v1021, %v1020
        %v1032 = vpack.c.b16 %v1023, %v1022
        %v1033 = vpack.c.b16 %v1025, %v1024
        %1042 = vmatprep.subr.bf16.mxu0 0
        %1043 = vmatpush1.bf16.msra.mxu0 %v1026
        %1044 = vmatprep.subr.bf16.mxu0 0
        %1045 = vmatpush1.bf16.msra.mxu0 %v1027
        %1046 = vmatprep.subr.bf16.mxu0 0
        %1047 = vmatpush1.bf16.msra.mxu0 %v1028
        %1048 = vmatprep.subr.bf16.mxu0 0
        %1049 = vmatpush1.bf16.msra.mxu0 %v1029
        %1050 = vmatprep.subr.bf16.mxu0 0
        %1051 = vmatpush1.bf16.msra.mxu0 %v1030
        %1052 = vmatprep.subr.bf16.mxu0 0
        %1053 = vmatpush1.bf16.msra.mxu0 %v1031
        %1054 = vmatprep.subr.bf16.mxu0 0
        %1055 = vmatpush1.bf16.msra.mxu0 %v1032
        %1056 = vmatprep.subr.bf16.mxu0 0
        %1057 = vmatpush1.bf16.msra.mxu0 %v1033
        %1058 = vmatprep.subr.bf16.mxu0 0
        %1059 = vmatpush1.bf16.msra.mxu0 0
        %1060 = vmatprep.subr.bf16.mxu0 0
        %1061 = vmatpush1.bf16.msra.mxu0 0
        %1062 = vmatprep.subr.bf16.mxu0 0
        %1063 = vmatpush1.bf16.msra.mxu0 0
        %1064 = vmatprep.subr.bf16.mxu0 0
        %1065 = vmatpush1.bf16.msra.mxu0 0
        %1066 = vmatprep.subr.bf16.mxu0 0
        %1067 = vmatpush1.bf16.msra.mxu0 0
        %1068 = vmatprep.subr.bf16.mxu0 0
        %1069 = vmatpush1.bf16.msra.mxu0 0
        %1070 = vmatprep.subr.bf16.mxu0 0
        %1071 = vmatpush1.bf16.msra.mxu0 0
        %1072 = vmatprep.subr.bf16.mxu0 0
        %1073 = vmatpush1.bf16.msra.mxu0 0
        %1074 = vmatprep.mubr.bf16.mxu0 0
        %1075 = vmatmul.mubr.bf16.gmra.mrb[0].mxu0 %v970
        %v1076 = vpop.f32.mrb[0].mxu0
        %v1077 = vadd.f32 %v992, %v1076
        %v1078 = vpop.f32.mrb[0].mxu0
        %v1079 = vpop.f32.mrb[0].mxu0
        %v1080 = vpop.f32.mrb[0].mxu0
        %1081 = vdwg.mxu0
        %v1082 = vmax.f32 %v1077, 0.0
        %v1083 = vpack.c.bf16 %v1082, %v1082
        %v1084 = vld [vmem:[#allocation8] sm:$0xf]
        %v1085 = vld [vmem:[#allocation8 + $0x4] sm:$0xf]
        %v1086 = vld [vmem:[#allocation8 + $0x8] sm:$0xf]
        %v1087 = vld [vmem:[#allocation8 + $0xc] sm:$0xf]
        %v1088 = vld [vmem:[#allocation8 + $0x10] sm:$0xf]
        %v1089 = vld [vmem:[#allocation8 + $0x14] sm:$0xf]
        %v1090 = vld [vmem:[#allocation8 + $0x18] sm:$0xf]
        %v1091 = vld [vmem:[#allocation8 + $0x1c] sm:$0xf]
        %v1092 = vld [vmem:[#allocation8 + $0x20] sm:$0xf]
        %v1093 = vld [vmem:[#allocation8 + $0x24] sm:$0xf]
        %v1094 = vld [vmem:[#allocation8 + $0x28] sm:$0xf]
        %v1095 = vld [vmem:[#allocation8 + $0x2c] sm:$0xf]
        %v1096 = vld [vmem:[#allocation8 + $0x30] sm:$0xf]
        %v1097 = vld [vmem:[#allocation8 + $0x34] sm:$0xf]
        %v1098 = vld [vmem:[#allocation8 + $0x38] sm:$0xf]
        %v1099 = vld [vmem:[#allocation8 + $0x3c] sm:$0xf]
        %v1100 = vld [vmem:[%s6] sm:$0x1]
        %v1102 = vlaneseq
        %v1103 = vshrl.u32 %v1102, 7
        %v1104 = vsub.s32 0, %v1103
        %v1105 = vrot.slane %v1100, %v1104
        %v1123 = vunpack.c.l.b16 %v1084
        %v1124 = vunpack.c.l.b16 %v1085
        %v1125 = vunpack.c.l.b16 %v1086
        %v1126 = vunpack.c.l.b16 %v1087
        %v1127 = vunpack.c.l.b16 %v1088
        %v1128 = vunpack.c.l.b16 %v1089
        %v1129 = vunpack.c.l.b16 %v1090
        %v1130 = vunpack.c.l.b16 %v1091
        %v1131 = vunpack.c.l.b16 %v1092
        %v1132 = vunpack.c.l.b16 %v1093
        %v1133 = vunpack.c.l.b16 %v1094
        %v1134 = vunpack.c.l.b16 %v1095
        %v1135 = vunpack.c.l.b16 %v1096
        %v1136 = vunpack.c.l.b16 %v1097
        %v1137 = vunpack.c.l.b16 %v1098
        %v1138 = vunpack.c.l.b16 %v1099
        %v1139 = vpack.c.b16 %v1124, %v1123
        %v1140 = vpack.c.b16 %v1126, %v1125
        %v1141 = vpack.c.b16 %v1128, %v1127
        %v1142 = vpack.c.b16 %v1130, %v1129
        %v1143 = vpack.c.b16 %v1132, %v1131
        %v1144 = vpack.c.b16 %v1134, %v1133
        %v1145 = vpack.c.b16 %v1136, %v1135
        %v1146 = vpack.c.b16 %v1138, %v1137
        %1155 = vmatprep.subr.bf16.mxu0 0
        %1156 = vmatpush1.bf16.msra.mxu0 %v1139
        %1157 = vmatprep.subr.bf16.mxu0 0
        %1158 = vmatpush1.bf16.msra.mxu0 %v1140
        %1159 = vmatprep.subr.bf16.mxu0 0
        %1160 = vmatpush1.bf16.msra.mxu0 %v1141
        %1161 = vmatprep.subr.bf16.mxu0 0
        %1162 = vmatpush1.bf16.msra.mxu0 %v1142
        %1163 = vmatprep.subr.bf16.mxu0 0
        %1164 = vmatpush1.bf16.msra.mxu0 %v1143
        %1165 = vmatprep.subr.bf16.mxu0 0
        %1166 = vmatpush1.bf16.msra.mxu0 %v1144
        %1167 = vmatprep.subr.bf16.mxu0 0
        %1168 = vmatpush1.bf16.msra.mxu0 %v1145
        %1169 = vmatprep.subr.bf16.mxu0 0
        %1170 = vmatpush1.bf16.msra.mxu0 %v1146
        %1171 = vmatprep.subr.bf16.mxu0 0
        %1172 = vmatpush1.bf16.msra.mxu0 0
        %1173 = vmatprep.subr.bf16.mxu0 0
        %1174 = vmatpush1.bf16.msra.mxu0 0
        %1175 = vmatprep.subr.bf16.mxu0 0
        %1176 = vmatpush1.bf16.msra.mxu0 0
        %1177 = vmatprep.subr.bf16.mxu0 0
        %1178 = vmatpush1.bf16.msra.mxu0 0
        %1179 = vmatprep.subr.bf16.mxu0 0
        %1180 = vmatpush1.bf16.msra.mxu0 0
        %1181 = vmatprep.subr.bf16.mxu0 0
        %1182 = vmatpush1.bf16.msra.mxu0 0
        %1183 = vmatprep.subr.bf16.mxu0 0
        %1184 = vmatpush1.bf16.msra.mxu0 0
        %1185 = vmatprep.subr.bf16.mxu0 0
        %1186 = vmatpush1.bf16.msra.mxu0 0
        %1187 = vmatprep.mubr.bf16.mxu0 0
        %1188 = vmatmul.mubr.bf16.gmra.mrb[0].mxu0 %v1083
        %v1189 = vpop.f32.mrb[0].mxu0
        %v1190 = vadd.f32 %v1105, %v1189
        %v1191 = vpop.f32.mrb[0].mxu0
        %v1192 = vpop.f32.mrb[0].mxu0
        %v1193 = vpop.f32.mrb[0].mxu0
        %1194 = vdwg.mxu0
        %1195 = vst [vmem:[%s338] sm:$0xff] %v1190
        %s1196 = sand.u32 %s186, 1
        %s1197 = scalar_lea.sflag [#allocation4], %s1196
        %s1198 = sand.u32 %s186, 1
        %s1199 = smul.addr %s1198, 8
        %s1200 = scalar_lea.vmem [#allocation10], %s1199
        // Predicated region
        $region65: #{tpu_custom_call.1} parent=47 // pred_check
          %p1201 = pneg %p196
        $region66: #{tpu_custom_call.1} parent=47 // pred_check_branch
          %1203 = sbr.rel (%p1201) target = $region68
        $region67: #{tpu_custom_call.1} parent=47 // pred_region
          %s1205 = ssub.s32 128, 128
          %1206 = vsyncadd %s1197, %s1205
          %s1207 = smul.addr %s26, 128
          %s1208 = scalar_lea.hbm %s7, %s1207
          %s1210 = sshll.u32 %s1200, 4
          %s1211 = int_to_ptr.vmem [resolvable:$true] %s1210
          %1213 = dma.vmem_to_hbm [thread:$0]  %s1211, 128, %s1208, %s1197
        $region68: #{tpu_custom_call.1} parent=47 // pred_fallthru
          _
      $region48: #{tpu_custom_call.1} parent=5 // pred_fallthru
        _
      %p1214 = scmp.le.s32.totalorder 2, %s21
      // Predicated region
      $region69: #{tpu_custom_call.1} parent=5 // pred_check
        %p1215 = pneg %p1214
      $region70: #{tpu_custom_call.1} parent=5 // pred_check_branch
        %1217 = sbr.rel (%p1215) target = $region72
      $region71: #{tpu_custom_call.1} parent=5 // pred_region
        %s1218 = ssub.s32 %s21, 2
        // Predicated region
        $region73: #{tpu_custom_call.1} parent=71 // pred_check
          %p1219 = pneg %p202
        $region74: #{tpu_custom_call.1} parent=71 // pred_check_branch
          %1221 = sbr.rel (%p1219) target = $region76
        $region75: #{tpu_custom_call.1} parent=71 // pred_region
          %s1222 = sand.u32 %s187, 1
          %s1223 = scalar_lea.sflag [#allocation4], %s1222
          %s1224 = sand.u32 %s187, 1
          %s1225 = smul.addr %s1224, 8
          %s1226 = scalar_lea.vmem [#allocation10], %s1225
          %1227 = dma.done %s1223, 128
        $region76: #{tpu_custom_call.1} parent=71 // pred_fallthru
          _
      $region72: #{tpu_custom_call.1} parent=5 // pred_fallthru
        _
    $region6: #{tpu_custom_call.1} parent=1 // loop_footer
      %s25 = sadd.s32 1, %s21
    $region7: #{tpu_custom_call.1} parent=1 // loop_footer_branch
      %20 = sbr.rel target = $region3
    $region8: #{tpu_custom_call.1} parent=1 // loop_exit
      _
    %1228 = vsyncpa [#allocation3], 1
    %s1229 = scalar_lea.sflag [#allocation3], 1
    %1230 = vsyncpa %s1229, 1
    %1231 = vsyncpa [#allocation6], 1
    %1232 = vsyncpa [#allocation9], 1
    %1233 = vsyncpa [#allocation4], 1
    %s1234 = scalar_lea.sflag [#allocation4], 1
    %1235 = vsyncpa %s1234, 1

</llo_original>
